<compile_context>
chip_gen: v7x
topology: tpu7x:2x2x1
jax: 0.10.0
libtpu: 0.0.40
codegen_flags: <defaults>
</compile_context>

<pallas_src>
import functools
from collections import namedtuple

import jax
import jax.numpy as jnp
import numpy as np
from jax.experimental import pallas as pl
from jax.experimental.pallas import tpu as pltpu

_LANE = 128
_MAX_TILE_ROWS = 2048  # 2048 x 128 x 4B = 1 MiB per slab buffer (double-buffered)

PackedFCN = namedtuple(
    "PackedFCN", ["w_blks", "b_blks", "feat", "pack", "in_dim", "out_dim"]
)


def _make_packed_fcn_kernel(num_layers):
    """Kernel over refs: (x_slab, w0, b0, w1, b1, ..., out_slab)."""

    def kernel(*refs):
        x_ref = refs[0]
        out_ref = refs[-1]
        prm = refs[1:-1]

        h = x_ref[...]  # (tile_rows, 128), f32, lane-packed samples
        for i in range(num_layers):
            w = prm[2 * i][...]        # (128, 128) block-diagonal, VMEM-resident
            b = prm[2 * i + 1][...]    # (1, 128)
            h = jnp.dot(h, w, preferred_element_type=jnp.float32) + b
            if i < num_layers - 1:
                # sigmoid as a single EUP transcendental (tanh) instead of exp+div
                h = 0.5 * (jnp.tanh(0.5 * h) + 1.0)
        out_ref[...] = h.astype(out_ref.dtype)

    return kernel


def init_fcn_params(key, sizes, dtype=jnp.float32):
    """Init mirroring nn.Linear (uniform +-1/sqrt(fan_in)).

    PyTorch Linear stores W as (out, in); we store the transpose (in, out) so
    the hot path is a lane-dense `x @ W`.  Bias stored as (1, out).
    """
    params = []
    for i in range(1, len(sizes)):
        fan_in, fan_out = sizes[i - 1], sizes[i]
        key, kw, kb = jax.random.split(key, 3)
        bound = 1.0 / np.sqrt(fan_in)
        w = jax.random.uniform(kw, (fan_in, fan_out), dtype, -bound, bound)
        b = jax.random.uniform(kb, (1, fan_out), dtype, -bound, bound)
        params.append((w, b))
    return params


def pack_fcn_params(params, dtype=jnp.float32):
    """Pack per-layer (W (in,out), b (1,out)) into 128-lane block-diagonal form."""
    in_dim = params[0][0].shape[0]
    out_dim = params[-1][0].shape[1]
    dims = [in_dim] + [w.shape[1] for w, _ in params]
    feat = 1
    while feat < max(dims):
        feat *= 2
    if feat > _LANE:
        raise ValueError("lane packing requires every layer width <= 128")
    pack = _LANE // feat

    eye = jnp.eye(pack, dtype=dtype)
    w_blks, b_blks = [], []
    for w, b in params:
        fin, fout = w.shape
        w_pad = jnp.zeros((feat, feat), dtype).at[:fin, :fout].set(w.astype(dtype))
        b_pad = jnp.zeros((feat,), dtype).at[:fout].set(b.reshape(-1).astype(dtype))
        w_blks.append(jnp.kron(eye, w_pad))                    # (128, 128)
        b_blks.append(jnp.tile(b_pad, pack).reshape(1, _LANE))  # (1, 128)
    return PackedFCN(tuple(w_blks), tuple(b_blks), feat, pack, in_dim, out_dim)


@functools.partial(
    jax.jit, static_argnames=("in_dim", "out_dim", "feat", "pack", "tile_rows")
)
def _fcn_forward_packed(x, w_blks, b_blks, *, in_dim, out_dim, feat, pack, tile_rows):
    batch = x.shape[0]
    num_layers = len(w_blks)
    slab_rows = pl.cdiv(batch, pack)
    grid_steps = pl.cdiv(slab_rows, tile_rows)
    padded_rows = grid_steps * tile_rows
    padded_batch = padded_rows * pack

    # Lane-dense input slab: `pack` samples per 128-lane row, each zero-padded
    # to a `feat`-lane slot (padded feature lanes hit zero weight rows).
    x_pad = jnp.zeros((padded_batch, feat), x.dtype).at[:batch, :in_dim].set(x)
    x_slab = x_pad.reshape(padded_rows, _LANE)

    flat_params = []
    for w, b in zip(w_blks, b_blks):
        flat_params.extend([w, b])

    # x/out slabs stream over the batch grid axis; weights & biases keep a
    # constant block index so Pallas fetches them once (VMEM-resident).
    in_specs = [pl.BlockSpec((tile_rows, _LANE), lambda i: (i, 0))]
    for w, b in zip(w_blks, b_blks):
        in_specs.append(pl.BlockSpec(w.shape, lambda i: (0, 0)))
        in_specs.append(pl.BlockSpec(b.shape, lambda i: (0, 0)))
    out_spec = pl.BlockSpec((tile_rows, _LANE), lambda i: (i, 0))

    out_slab = pl.pallas_call(
        _make_packed_fcn_kernel(num_layers),
        out_shape=jax.ShapeDtypeStruct((padded_rows, _LANE), x.dtype),
        grid=(grid_steps,),
        in_specs=in_specs,
        out_specs=out_spec,
        compiler_params=pltpu.CompilerParams(
            # Batch tiles are independent -> parallel (uses both TCs on v7x).
            dimension_semantics=("parallel",),
        ),
    )(x_slab, *flat_params)

    # Un-pack the lane-dense output slab back to (batch, out_dim).
    out = out_slab.reshape(padded_batch, feat)[:batch, :out_dim]
    return out


def fcn_forward(x, packed, tile_rows=None):
    """Full MLP forward in one lane-packed, batch-tiled Pallas kernel."""
    batch = x.shape[0]
    slab_rows = pl.cdiv(batch, packed.pack)
    if tile_rows is None:
        # Few, large, even-count tiles: amortize ~0.35us/step and give both
        # v7x TensorCores work; VMEM is not a constraint at these tile sizes.
        steps = max(2, pl.cdiv(slab_rows, _MAX_TILE_ROWS))
        steps += steps % 2
        tile_rows = pl.cdiv(slab_rows, steps)
    tile_rows = max(8, pl.cdiv(int(tile_rows), 8) * 8)
    return _fcn_forward_packed(
        x,
        packed.w_blks,
        packed.b_blks,
        in_dim=packed.in_dim,
        out_dim=packed.out_dim,
        feat=packed.feat,
        pack=packed.pack,
        tile_rows=int(tile_rows),
    )


def fcn_reference(x, params):
    """Pure-JAX reference matching the PyTorch forward semantics."""
    h = x
    for i, (w, b) in enumerate(params):
        h = (
            jnp.dot(h, w, preferred_element_type=jnp.float32,
                    precision=jax.lax.Precision.HIGHEST)
            + b
        )
        if i < len(params) - 1:
            h = jax.nn.sigmoid(h)
    return h


if __name__ == "__main__":
    # Small PINN-like config: input dim 2 (e.g. (x, t)), 3 hidden layers of 32,
    # scalar output.  batch=512 -> slab of 128 rows -> 2 parallel grid tiles.
    sizes = [2, 32, 32, 32, 1]
    batch = 512

    key = jax.random.PRNGKey(0)
    key, kx = jax.random.split(key)
    x = jax.random.normal(kx, (batch, sizes[0]), jnp.float32)

    params = init_fcn_params(key, sizes, jnp.float32)
    packed = pack_fcn_params(params)

    out = jax.block_until_ready(fcn_forward(x, packed))

    ref = jax.block_until_ready(fcn_reference(x, params))
    np.testing.assert_allclose(np.asarray(out), np.asarray(ref), rtol=2e-5, atol=2e-5)

    print("KERNEL_OK")
</pallas_src>

<mosaic_0001>
module attributes {stable_mosaic.version = 11 : i64} {
  func.func @kernel(%arg0: i32, %arg1: memref<64x128xf32, #tpu.memory_space<vmem>>, %arg2: memref<128x128xf32, #tpu.memory_space<vmem>>, %arg3: memref<1x128xf32, #tpu.memory_space<vmem>>, %arg4: memref<128x128xf32, #tpu.memory_space<vmem>>, %arg5: memref<1x128xf32, #tpu.memory_space<vmem>>, %arg6: memref<128x128xf32, #tpu.memory_space<vmem>>, %arg7: memref<1x128xf32, #tpu.memory_space<vmem>>, %arg8: memref<128x128xf32, #tpu.memory_space<vmem>>, %arg9: memref<1x128xf32, #tpu.memory_space<vmem>>, %arg10: memref<64x128xf32, #tpu.memory_space<vmem>>) attributes {dimension_semantics = [#tpu.dimension_semantics<parallel>], iteration_bounds = array<i64: 2>, scalar_prefetch = 0 : i64, scratch_operands = 0 : i64, tpu.core_type = #tpu.core_type<tc>, window_params = [{transform_indices = @transform_0, window_bounds = array<i64: 64, 128>}, {pipeline_mode = #tpu.pipeline_mode<synchronous>, transform_indices = @transform_1, window_bounds = array<i64: 128, 128>}, {pipeline_mode = #tpu.pipeline_mode<synchronous>, transform_indices = @transform_2, window_bounds = array<i64: 1, 128>}, {pipeline_mode = #tpu.pipeline_mode<synchronous>, transform_indices = @transform_3, window_bounds = array<i64: 128, 128>}, {pipeline_mode = #tpu.pipeline_mode<synchronous>, transform_indices = @transform_4, window_bounds = array<i64: 1, 128>}, {pipeline_mode = #tpu.pipeline_mode<synchronous>, transform_indices = @transform_5, window_bounds = array<i64: 128, 128>}, {pipeline_mode = #tpu.pipeline_mode<synchronous>, transform_indices = @transform_6, window_bounds = array<i64: 1, 128>}, {pipeline_mode = #tpu.pipeline_mode<synchronous>, transform_indices = @transform_7, window_bounds = array<i64: 128, 128>}, {pipeline_mode = #tpu.pipeline_mode<synchronous>, transform_indices = @transform_8, window_bounds = array<i64: 1, 128>}, {transform_indices = @transform_9, window_bounds = array<i64: 64, 128>}]} {
    %c0 = arith.constant 0 : index
    %c0_0 = arith.constant 0 : index
    %0 = vector.load %arg1[%c0, %c0_0] : memref<64x128xf32, #tpu.memory_space<vmem>>, vector<64x128xf32>
    %c0_1 = arith.constant 0 : index
    %c0_2 = arith.constant 0 : index
    %1 = vector.load %arg2[%c0_1, %c0_2] : memref<128x128xf32, #tpu.memory_space<vmem>>, vector<128x128xf32>
    %c0_3 = arith.constant 0 : index
    %c0_4 = arith.constant 0 : index
    %2 = vector.load %arg3[%c0_3, %c0_4] : memref<1x128xf32, #tpu.memory_space<vmem>>, vector<1x128xf32>
    %cst = arith.constant dense<0.000000e+00> : vector<64x128xf32>
    %3 = tpu.matmul %0, %1, %cst {dimension_numbers = #tpu.dot_dimension_numbers<[1], [0], [0], [1], [0, 0, 1, 1], [], []>} : vector<64x128xf32>, vector<128x128xf32>, vector<64x128xf32> -> vector<64x128xf32>
    %4 = vector.broadcast %2 : vector<1x128xf32> to vector<64x128xf32>
    %5 = arith.addf %3, %4 : vector<64x128xf32>
    %cst_5 = arith.constant 5.000000e-01 : f32
    %6 = vector.broadcast %cst_5 : f32 to vector<64x128xf32>
    %7 = arith.mulf %6, %5 : vector<64x128xf32>
    %8 = math.tanh %7 : vector<64x128xf32>
    %cst_6 = arith.constant 1.000000e+00 : f32
    %9 = vector.broadcast %cst_6 : f32 to vector<64x128xf32>
    %10 = arith.addf %8, %9 : vector<64x128xf32>
    %cst_7 = arith.constant 5.000000e-01 : f32
    %11 = vector.broadcast %cst_7 : f32 to vector<64x128xf32>
    %12 = arith.mulf %11, %10 : vector<64x128xf32>
    %c0_8 = arith.constant 0 : index
    %c0_9 = arith.constant 0 : index
    %13 = vector.load %arg4[%c0_8, %c0_9] : memref<128x128xf32, #tpu.memory_space<vmem>>, vector<128x128xf32>
    %c0_10 = arith.constant 0 : index
    %c0_11 = arith.constant 0 : index
    %14 = vector.load %arg5[%c0_10, %c0_11] : memref<1x128xf32, #tpu.memory_space<vmem>>, vector<1x128xf32>
    %cst_12 = arith.constant dense<0.000000e+00> : vector<64x128xf32>
    %15 = tpu.matmul %12, %13, %cst_12 {dimension_numbers = #tpu.dot_dimension_numbers<[1], [0], [0], [1], [0, 0, 1, 1], [], []>} : vector<64x128xf32>, vector<128x128xf32>, vector<64x128xf32> -> vector<64x128xf32>
    %16 = vector.broadcast %14 : vector<1x128xf32> to vector<64x128xf32>
    %17 = arith.addf %15, %16 : vector<64x128xf32>
    %cst_13 = arith.constant 5.000000e-01 : f32
    %18 = vector.broadcast %cst_13 : f32 to vector<64x128xf32>
    %19 = arith.mulf %18, %17 : vector<64x128xf32>
    %20 = math.tanh %19 : vector<64x128xf32>
    %cst_14 = arith.constant 1.000000e+00 : f32
    %21 = vector.broadcast %cst_14 : f32 to vector<64x128xf32>
    %22 = arith.addf %20, %21 : vector<64x128xf32>
    %cst_15 = arith.constant 5.000000e-01 : f32
    %23 = vector.broadcast %cst_15 : f32 to vector<64x128xf32>
    %24 = arith.mulf %23, %22 : vector<64x128xf32>
    %c0_16 = arith.constant 0 : index
    %c0_17 = arith.constant 0 : index
    %25 = vector.load %arg6[%c0_16, %c0_17] : memref<128x128xf32, #tpu.memory_space<vmem>>, vector<128x128xf32>
    %c0_18 = arith.constant 0 : index
    %c0_19 = arith.constant 0 : index
    %26 = vector.load %arg7[%c0_18, %c0_19] : memref<1x128xf32, #tpu.memory_space<vmem>>, vector<1x128xf32>
    %cst_20 = arith.constant dense<0.000000e+00> : vector<64x128xf32>
    %27 = tpu.matmul %24, %25, %cst_20 {dimension_numbers = #tpu.dot_dimension_numbers<[1], [0], [0], [1], [0, 0, 1, 1], [], []>} : vector<64x128xf32>, vector<128x128xf32>, vector<64x128xf32> -> vector<64x128xf32>
    %28 = vector.broadcast %26 : vector<1x128xf32> to vector<64x128xf32>
    %29 = arith.addf %27, %28 : vector<64x128xf32>
    %cst_21 = arith.constant 5.000000e-01 : f32
    %30 = vector.broadcast %cst_21 : f32 to vector<64x128xf32>
    %31 = arith.mulf %30, %29 : vector<64x128xf32>
    %32 = math.tanh %31 : vector<64x128xf32>
    %cst_22 = arith.constant 1.000000e+00 : f32
    %33 = vector.broadcast %cst_22 : f32 to vector<64x128xf32>
    %34 = arith.addf %32, %33 : vector<64x128xf32>
    %cst_23 = arith.constant 5.000000e-01 : f32
    %35 = vector.broadcast %cst_23 : f32 to vector<64x128xf32>
    %36 = arith.mulf %35, %34 : vector<64x128xf32>
    %c0_24 = arith.constant 0 : index
    %c0_25 = arith.constant 0 : index
    %37 = vector.load %arg8[%c0_24, %c0_25] : memref<128x128xf32, #tpu.memory_space<vmem>>, vector<128x128xf32>
    %c0_26 = arith.constant 0 : index
    %c0_27 = arith.constant 0 : index
    %38 = vector.load %arg9[%c0_26, %c0_27] : memref<1x128xf32, #tpu.memory_space<vmem>>, vector<1x128xf32>
    %cst_28 = arith.constant dense<0.000000e+00> : vector<64x128xf32>
    %39 = tpu.matmul %36, %37, %cst_28 {dimension_numbers = #tpu.dot_dimension_numbers<[1], [0], [0], [1], [0, 0, 1, 1], [], []>} : vector<64x128xf32>, vector<128x128xf32>, vector<64x128xf32> -> vector<64x128xf32>
    %40 = vector.broadcast %38 : vector<1x128xf32> to vector<64x128xf32>
    %41 = arith.addf %39, %40 : vector<64x128xf32>
    %c0_29 = arith.constant 0 : index
    %c0_30 = arith.constant 0 : index
    %42 = vector.load %arg10[%c0_29, %c0_30] : memref<64x128xf32, #tpu.memory_space<vmem>>, vector<64x128xf32>
    tpu.vector_store %arg10[%c0_29, %c0_30], %41 {strides = array<i32>} : memref<64x128xf32, #tpu.memory_space<vmem>>, vector<64x128xf32>,
    return
  }
  func.func @transform_0(%arg0: i32) -> (i32, i32) {
    %c0_i32 = arith.constant 0 : i32
    %c0_i32_0 = arith.constant 0 : i32
    return %arg0, %c0_i32 : i32, i32
  }
  func.func @transform_1(%arg0: i32) -> (i32, i32) {
    %c0_i32 = arith.constant 0 : i32
    %c0_i32_0 = arith.constant 0 : i32
    %c0_i32_1 = arith.constant 0 : i32
    return %c0_i32, %c0_i32_0 : i32, i32
  }
  func.func @transform_2(%arg0: i32) -> (i32, i32) {
    %c0_i32 = arith.constant 0 : i32
    %c0_i32_0 = arith.constant 0 : i32
    %c0_i32_1 = arith.constant 0 : i32
    return %c0_i32, %c0_i32_0 : i32, i32
  }
  func.func @transform_3(%arg0: i32) -> (i32, i32) {
    %c0_i32 = arith.constant 0 : i32
    %c0_i32_0 = arith.constant 0 : i32
    %c0_i32_1 = arith.constant 0 : i32
    return %c0_i32, %c0_i32_0 : i32, i32
  }
  func.func @transform_4(%arg0: i32) -> (i32, i32) {
    %c0_i32 = arith.constant 0 : i32
    %c0_i32_0 = arith.constant 0 : i32
    %c0_i32_1 = arith.constant 0 : i32
    return %c0_i32, %c0_i32_0 : i32, i32
  }
  func.func @transform_5(%arg0: i32) -> (i32, i32) {
    %c0_i32 = arith.constant 0 : i32
    %c0_i32_0 = arith.constant 0 : i32
    %c0_i32_1 = arith.constant 0 : i32
    return %c0_i32, %c0_i32_0 : i32, i32
  }
  func.func @transform_6(%arg0: i32) -> (i32, i32) {
    %c0_i32 = arith.constant 0 : i32
    %c0_i32_0 = arith.constant 0 : i32
    %c0_i32_1 = arith.constant 0 : i32
    return %c0_i32, %c0_i32_0 : i32, i32
  }
  func.func @transform_7(%arg0: i32) -> (i32, i32) {
    %c0_i32 = arith.constant 0 : i32
    %c0_i32_0 = arith.constant 0 : i32
    %c0_i32_1 = arith.constant 0 : i32
    return %c0_i32, %c0_i32_0 : i32, i32
  }
  func.func @transform_8(%arg0: i32) -> (i32, i32) {
    %c0_i32 = arith.constant 0 : i32
    %c0_i32_0 = arith.constant 0 : i32
    %c0_i32_1 = arith.constant 0 : i32
    return %c0_i32, %c0_i32_0 : i32, i32
  }
  func.func @transform_9(%arg0: i32) -> (i32, i32) {
    %c0_i32 = arith.constant 0 : i32
    %c0_i32_0 = arith.constant 0 : i32
    return %arg0, %c0_i32 : i32, i32
  }
}

</mosaic_0001>

<llo_original>
// kernel: _fcn_forward_packed.1
$region0: #{_fcn_forward_packed.1}
  #allocation0 [shape = 'u32[]', space=smem, size = 0x4, offset = 0x4, fixed_abs, tag = 'smem constant byte address 0x4 - core index']
  #allocation1 [shape = 'u32[144,128]{1,0:T(1,128)}', space=vmem, size = 0x12000, scoped, tag = 'internal scratch']
  %s0 = inlined_call_operand.vmem [shape: f32[128,128], index: 0, kind: input, shape index: {}]
  %s1 = inlined_call_operand.vmem [shape: f32[128,128], index: 1, kind: input, shape index: {}]
  %s2 = inlined_call_operand.vmem [shape: f32[1,128], index: 2, kind: input, shape index: {}]
  %s3 = inlined_call_operand.vmem [shape: f32[128,128], index: 3, kind: input, shape index: {}]
  %s4 = inlined_call_operand.vmem [shape: f32[1,128], index: 4, kind: input, shape index: {}]
  %s5 = inlined_call_operand.vmem [shape: f32[128,128], index: 5, kind: input, shape index: {}]
  %s6 = inlined_call_operand.vmem [shape: f32[1,128], index: 6, kind: input, shape index: {}]
  %s7 = inlined_call_operand.vmem [shape: f32[128,128], index: 7, kind: input, shape index: {}]
  %s8 = inlined_call_operand.vmem [shape: f32[1,128], index: 8, kind: input, shape index: {}]
  %s9 = inlined_call_operand.vmem [shape: f32[128,128], index: 9, kind: output, shape index: {}]
  %s10 = sld [smem:[#allocation0]]
  $region69: #{_fcn_forward_packed.1} parent=0
    _
  %s12 = ssub.s32 1, %s10
  %s13 = scalar_select 0, %s12, %s10
  loop: start=0, step=1, limit=4
  $region2: #{_fcn_forward_packed.1} parent=0 // loop_pre_header
    _
  $region3: #{_fcn_forward_packed.1} parent=0 // loop_header
    %s15 = sphi 0, %s19
    %p16 = scmp.ge.s32.totalorder %s15, 4
    %s25 = sphi 0, %s27
    %s28 = sphi 0, %s25
    %s29 = sphi 0, %s28
    %s45 = sphi 0, %s29
    %s49 = sphi 0, %s49
    %s51 = sphi 0, %s49
    %s52 = sphi 0, %s51
    %s66 = sphi 0, %s52
    %s70 = sphi 0, %s70
    %s72 = sphi 0, %s70
    %s73 = sphi 0, %s72
    %s87 = sphi 0, %s73
    %s91 = sphi 0, %s91
    %s93 = sphi 0, %s91
    %s94 = sphi 0, %s93
    %s108 = sphi 0, %s94
    %s112 = sphi 0, %s112
    %s114 = sphi 0, %s112
    %s115 = sphi 0, %s114
    %s129 = sphi 0, %s115
    %s133 = sphi 0, %s133
    %s135 = sphi 0, %s133
    %s136 = sphi 0, %s135
    %s150 = sphi 0, %s136
    %s154 = sphi 0, %s154
    %s156 = sphi 0, %s154
    %s157 = sphi 0, %s156
    %s171 = sphi 0, %s157
    %s175 = sphi 0, %s175
    %s177 = sphi 0, %s175
    %s178 = sphi 0, %s177
    %s192 = sphi 0, %s178
    %s196 = sphi 0, %s196
    %s198 = sphi 0, %s196
    %s199 = sphi 0, %s198
    %s213 = sphi 0, %s199
    %s219 = sphi 0, %s221
    %s222 = sphi 0, %s219
    %s223 = sphi 0, %s222
    %s239 = sphi 0, %s223
  $region4: #{_fcn_forward_packed.1} parent=0 // loop_header_branch
    %18 = sbr.rel (%p16) target = $region8
  $region5: #{_fcn_forward_packed.1} parent=0 // loop_body
    %s20 = ssub.s32 %s15, 1
    %s21 = ssub.s32 %s15, 2
    %s22 = sadd.s32 %s15, 1
    %s23 = ssub.s32 %s15, %s22
    %p24 = scmp.eq.s32.totalorder %s23, 0
    %s26 = sadd.s32 %s25, 1
    %s27 = scalar_select %p24, %s25, %s26
    %p30 = pneg %p24
    %p31 = scmp.eq.s32.totalorder %s15, 1
    %p32 = por %p30, %p31
    %p33 = scmp.ne.s32.totalorder %s25, %s28
    %p34 = scmp.eq.s32.totalorder %s15, 0
    %p35 = por %p33, %p34
    %p36 = scmp.ne.s32.totalorder %s25, %s28
    %p37 = scmp.eq.s32.totalorder %s20, 1
    %p38 = por %p36, %p37
    %p39 = scmp.ne.s32.totalorder %s28, %s29
    %p40 = scmp.eq.s32.totalorder %s20, 0
    %p41 = por %p39, %p40
    %p42 = scmp.ne.s32.totalorder %s28, %s29
    %p43 = scmp.eq.s32.totalorder %s21, 1
    %p44 = por %p42, %p43
    %p46 = scmp.ne.s32.totalorder %s29, %s45
    %p47 = scmp.eq.s32.totalorder %s21, 0
    %p48 = por %p46, %p47
    %s50 = sadd.s32 %s49, 1
    %p53 = scmp.eq.s32.totalorder %s15, 1
    %p54 = scmp.ne.s32.totalorder %s49, %s51
    %p55 = scmp.eq.s32.totalorder %s15, 0
    %p56 = por %p54, %p55
    %p57 = scmp.ne.s32.totalorder %s49, %s51
    %p58 = scmp.eq.s32.totalorder %s20, 1
    %p59 = por %p57, %p58
    %p60 = scmp.ne.s32.totalorder %s51, %s52
    %p61 = scmp.eq.s32.totalorder %s20, 0
    %p62 = por %p60, %p61
    %p63 = scmp.ne.s32.totalorder %s51, %s52
    %p64 = scmp.eq.s32.totalorder %s21, 1
    %p65 = por %p63, %p64
    %p67 = scmp.ne.s32.totalorder %s52, %s66
    %p68 = scmp.eq.s32.totalorder %s21, 0
    %p69 = por %p67, %p68
    %s71 = sadd.s32 %s70, 1
    %p74 = scmp.eq.s32.totalorder %s15, 1
    %p75 = scmp.ne.s32.totalorder %s70, %s72
    %p76 = scmp.eq.s32.totalorder %s15, 0
    %p77 = por %p75, %p76
    %p78 = scmp.ne.s32.totalorder %s70, %s72
    %p79 = scmp.eq.s32.totalorder %s20, 1
    %p80 = por %p78, %p79
    %p81 = scmp.ne.s32.totalorder %s72, %s73
    %p82 = scmp.eq.s32.totalorder %s20, 0
    %p83 = por %p81, %p82
    %p84 = scmp.ne.s32.totalorder %s72, %s73
    %p85 = scmp.eq.s32.totalorder %s21, 1
    %p86 = por %p84, %p85
    %p88 = scmp.ne.s32.totalorder %s73, %s87
    %p89 = scmp.eq.s32.totalorder %s21, 0
    %p90 = por %p88, %p89
    %s92 = sadd.s32 %s91, 1
    %p95 = scmp.eq.s32.totalorder %s15, 1
    %p96 = scmp.ne.s32.totalorder %s91, %s93
    %p97 = scmp.eq.s32.totalorder %s15, 0
    %p98 = por %p96, %p97
    %p99 = scmp.ne.s32.totalorder %s91, %s93
    %p100 = scmp.eq.s32.totalorder %s20, 1
    %p101 = por %p99, %p100
    %p102 = scmp.ne.s32.totalorder %s93, %s94
    %p103 = scmp.eq.s32.totalorder %s20, 0
    %p104 = por %p102, %p103
    %p105 = scmp.ne.s32.totalorder %s93, %s94
    %p106 = scmp.eq.s32.totalorder %s21, 1
    %p107 = por %p105, %p106
    %p109 = scmp.ne.s32.totalorder %s94, %s108
    %p110 = scmp.eq.s32.totalorder %s21, 0
    %p111 = por %p109, %p110
    %s113 = sadd.s32 %s112, 1
    %p116 = scmp.eq.s32.totalorder %s15, 1
    %p117 = scmp.ne.s32.totalorder %s112, %s114
    %p118 = scmp.eq.s32.totalorder %s15, 0
    %p119 = por %p117, %p118
    %p120 = scmp.ne.s32.totalorder %s112, %s114
    %p121 = scmp.eq.s32.totalorder %s20, 1
    %p122 = por %p120, %p121
    %p123 = scmp.ne.s32.totalorder %s114, %s115
    %p124 = scmp.eq.s32.totalorder %s20, 0
    %p125 = por %p123, %p124
    %p126 = scmp.ne.s32.totalorder %s114, %s115
    %p127 = scmp.eq.s32.totalorder %s21, 1
    %p128 = por %p126, %p127
    %p130 = scmp.ne.s32.totalorder %s115, %s129
    %p131 = scmp.eq.s32.totalorder %s21, 0
    %p132 = por %p130, %p131
    %s134 = sadd.s32 %s133, 1
    %p137 = scmp.eq.s32.totalorder %s15, 1
    %p138 = scmp.ne.s32.totalorder %s133, %s135
    %p139 = scmp.eq.s32.totalorder %s15, 0
    %p140 = por %p138, %p139
    %p141 = scmp.ne.s32.totalorder %s133, %s135
    %p142 = scmp.eq.s32.totalorder %s20, 1
    %p143 = por %p141, %p142
    %p144 = scmp.ne.s32.totalorder %s135, %s136
    %p145 = scmp.eq.s32.totalorder %s20, 0
    %p146 = por %p144, %p145
    %p147 = scmp.ne.s32.totalorder %s135, %s136
    %p148 = scmp.eq.s32.totalorder %s21, 1
    %p149 = por %p147, %p148
    %p151 = scmp.ne.s32.totalorder %s136, %s150
    %p152 = scmp.eq.s32.totalorder %s21, 0
    %p153 = por %p151, %p152
    %s155 = sadd.s32 %s154, 1
    %p158 = scmp.eq.s32.totalorder %s15, 1
    %p159 = scmp.ne.s32.totalorder %s154, %s156
    %p160 = scmp.eq.s32.totalorder %s15, 0
    %p161 = por %p159, %p160
    %p162 = scmp.ne.s32.totalorder %s154, %s156
    %p163 = scmp.eq.s32.totalorder %s20, 1
    %p164 = por %p162, %p163
    %p165 = scmp.ne.s32.totalorder %s156, %s157
    %p166 = scmp.eq.s32.totalorder %s20, 0
    %p167 = por %p165, %p166
    %p168 = scmp.ne.s32.totalorder %s156, %s157
    %p169 = scmp.eq.s32.totalorder %s21, 1
    %p170 = por %p168, %p169
    %p172 = scmp.ne.s32.totalorder %s157, %s171
    %p173 = scmp.eq.s32.totalorder %s21, 0
    %p174 = por %p172, %p173
    %s176 = sadd.s32 %s175, 1
    %p179 = scmp.eq.s32.totalorder %s15, 1
    %p180 = scmp.ne.s32.totalorder %s175, %s177
    %p181 = scmp.eq.s32.totalorder %s15, 0
    %p182 = por %p180, %p181
    %p183 = scmp.ne.s32.totalorder %s175, %s177
    %p184 = scmp.eq.s32.totalorder %s20, 1
    %p185 = por %p183, %p184
    %p186 = scmp.ne.s32.totalorder %s177, %s178
    %p187 = scmp.eq.s32.totalorder %s20, 0
    %p188 = por %p186, %p187
    %p189 = scmp.ne.s32.totalorder %s177, %s178
    %p190 = scmp.eq.s32.totalorder %s21, 1
    %p191 = por %p189, %p190
    %p193 = scmp.ne.s32.totalorder %s178, %s192
    %p194 = scmp.eq.s32.totalorder %s21, 0
    %p195 = por %p193, %p194
    %s197 = sadd.s32 %s196, 1
    %p200 = scmp.eq.s32.totalorder %s15, 1
    %p201 = scmp.ne.s32.totalorder %s196, %s198
    %p202 = scmp.eq.s32.totalorder %s15, 0
    %p203 = por %p201, %p202
    %p204 = scmp.ne.s32.totalorder %s196, %s198
    %p205 = scmp.eq.s32.totalorder %s20, 1
    %p206 = por %p204, %p205
    %p207 = scmp.ne.s32.totalorder %s198, %s199
    %p208 = scmp.eq.s32.totalorder %s20, 0
    %p209 = por %p207, %p208
    %p210 = scmp.ne.s32.totalorder %s198, %s199
    %p211 = scmp.eq.s32.totalorder %s21, 1
    %p212 = por %p210, %p211
    %p214 = scmp.ne.s32.totalorder %s199, %s213
    %p215 = scmp.eq.s32.totalorder %s21, 0
    %p216 = por %p214, %p215
    %s217 = ssub.s32 %s15, %s22
    %p218 = scmp.eq.s32.totalorder %s217, 0
    %s220 = sadd.s32 %s219, 1
    %s221 = scalar_select %p218, %s219, %s220
    %p224 = pneg %p218
    %p225 = scmp.eq.s32.totalorder %s15, 1
    %p226 = por %p224, %p225
    %p227 = scmp.ne.s32.totalorder %s219, %s222
    %p228 = scmp.eq.s32.totalorder %s15, 0
    %p229 = por %p227, %p228
    %p230 = scmp.ne.s32.totalorder %s219, %s222
    %p231 = scmp.eq.s32.totalorder %s20, 1
    %p232 = por %p230, %p231
    %p233 = scmp.ne.s32.totalorder %s222, %s223
    %p234 = scmp.eq.s32.totalorder %s20, 0
    %p235 = por %p233, %p234
    %p236 = scmp.ne.s32.totalorder %s222, %s223
    %p237 = scmp.eq.s32.totalorder %s21, 1
    %p238 = por %p236, %p237
    %p240 = scmp.ne.s32.totalorder %s223, %s239
    %p241 = scmp.eq.s32.totalorder %s21, 0
    %p242 = por %p240, %p241
    %p243 = scmp.le.s32.totalorder 1, %s15
    %p244 = scmp.lt.s32.totalorder %s15, 3
    %p245 = pnand %p243, %p244
    %p246 = pneg %p245
    // Predicated region
    $region9: #{_fcn_forward_packed.1} parent=5 // pred_check
      _
    $region10: #{_fcn_forward_packed.1} parent=5 // pred_check_branch
      %248 = sbr.rel (%p245) target = $region12
    $region11: #{_fcn_forward_packed.1} parent=5 // pred_region
      %s249 = ssub.s32 %s15, 1
      // Predicated region
      $region13: #{_fcn_forward_packed.1} parent=11 // pred_check
        %p250 = pneg %p62
      $region14: #{_fcn_forward_packed.1} parent=11 // pred_check_branch
        %252 = sbr.rel (%p250) target = $region16
      $region15: #{_fcn_forward_packed.1} parent=11 // pred_region
        _
      $region16: #{_fcn_forward_packed.1} parent=11 // pred_fallthru
        _
      // Predicated region
      $region17: #{_fcn_forward_packed.1} parent=11 // pred_check
        %p253 = pneg %p83
      $region18: #{_fcn_forward_packed.1} parent=11 // pred_check_branch
        %255 = sbr.rel (%p253) target = $region20
      $region19: #{_fcn_forward_packed.1} parent=11 // pred_region
        _
      $region20: #{_fcn_forward_packed.1} parent=11 // pred_fallthru
        _
      // Predicated region
      $region21: #{_fcn_forward_packed.1} parent=11 // pred_check
        %p256 = pneg %p104
      $region22: #{_fcn_forward_packed.1} parent=11 // pred_check_branch
        %258 = sbr.rel (%p256) target = $region24
      $region23: #{_fcn_forward_packed.1} parent=11 // pred_region
        _
      $region24: #{_fcn_forward_packed.1} parent=11 // pred_fallthru
        _
      // Predicated region
      $region25: #{_fcn_forward_packed.1} parent=11 // pred_check
        %p259 = pneg %p125
      $region26: #{_fcn_forward_packed.1} parent=11 // pred_check_branch
        %261 = sbr.rel (%p259) target = $region28
      $region27: #{_fcn_forward_packed.1} parent=11 // pred_region
        _
      $region28: #{_fcn_forward_packed.1} parent=11 // pred_fallthru
        _
      // Predicated region
      $region29: #{_fcn_forward_packed.1} parent=11 // pred_check
        %p262 = pneg %p146
      $region30: #{_fcn_forward_packed.1} parent=11 // pred_check_branch
        %264 = sbr.rel (%p262) target = $region32
      $region31: #{_fcn_forward_packed.1} parent=11 // pred_region
        _
      $region32: #{_fcn_forward_packed.1} parent=11 // pred_fallthru
        _
      // Predicated region
      $region33: #{_fcn_forward_packed.1} parent=11 // pred_check
        %p265 = pneg %p167
      $region34: #{_fcn_forward_packed.1} parent=11 // pred_check_branch
        %267 = sbr.rel (%p265) target = $region36
      $region35: #{_fcn_forward_packed.1} parent=11 // pred_region
        _
      $region36: #{_fcn_forward_packed.1} parent=11 // pred_fallthru
        _
      // Predicated region
      $region37: #{_fcn_forward_packed.1} parent=11 // pred_check
        %p268 = pneg %p188
      $region38: #{_fcn_forward_packed.1} parent=11 // pred_check_branch
        %270 = sbr.rel (%p268) target = $region40
      $region39: #{_fcn_forward_packed.1} parent=11 // pred_region
        _
      $region40: #{_fcn_forward_packed.1} parent=11 // pred_fallthru
        _
      // Predicated region
      $region41: #{_fcn_forward_packed.1} parent=11 // pred_check
        %p271 = pneg %p209
      $region42: #{_fcn_forward_packed.1} parent=11 // pred_check_branch
        %273 = sbr.rel (%p271) target = $region44
      $region43: #{_fcn_forward_packed.1} parent=11 // pred_region
        _
      $region44: #{_fcn_forward_packed.1} parent=11 // pred_fallthru
        _
    $region12: #{_fcn_forward_packed.1} parent=5 // pred_fallthru
      _
    %p274 = scmp.lt.s32.totalorder %s15, 2
    // Predicated region
    $region45: #{_fcn_forward_packed.1} parent=5 // pred_check
      %p275 = pneg %p274
    $region46: #{_fcn_forward_packed.1} parent=5 // pred_check_branch
      %277 = sbr.rel (%p275) target = $region48
    $region47: #{_fcn_forward_packed.1} parent=5 // pred_region
      // Predicated region
      $region49: #{_fcn_forward_packed.1} parent=47 // pred_check
        %p278 = pneg %p35
      $region50: #{_fcn_forward_packed.1} parent=47 // pred_check_branch
        %280 = sbr.rel (%p278) target = $region52
      $region51: #{_fcn_forward_packed.1} parent=47 // pred_region
        %s281 = smul.u32 8, %s15
        %p282 = scmp.lt.s32.totalorder %s281, 15
        %s283 = scalar_select %p282, %s281, 15
        %s284 = smul.addr %s283, 8
        %s285 = scalar_lea.vmem %s0, %s284
        %s286 = smul.u32 8, %s15
      $region52: #{_fcn_forward_packed.1} parent=47 // pred_fallthru
        _
    $region48: #{_fcn_forward_packed.1} parent=5 // pred_fallthru
      _
    %p287 = scmp.le.s32.totalorder 1, %s15
    %p288 = scmp.lt.s32.totalorder %s15, 3
    %p289 = pnand %p287, %p288
    %p290 = pneg %p289
    // Predicated region
    $region53: #{_fcn_forward_packed.1} parent=5 // pred_check
      _
    $region54: #{_fcn_forward_packed.1} parent=5 // pred_check_branch
      %292 = sbr.rel (%p289) target = $region56
    $region55: #{_fcn_forward_packed.1} parent=5 // pred_region
      %s293 = ssub.s32 %s15, 1
      %s294 = smul.u32 8, %s20
      %p295 = scmp.lt.s32.totalorder %s294, 15
      %s296 = scalar_select %p295, %s294, 15
      %s297 = smul.addr %s296, 8
      %s298 = scalar_lea.vmem %s0, %s297
      %p299 = pneg %p41
      %p300 = pneg %p38
      %p301 = pneg %p62
      %p302 = pneg %p59
      %p303 = pneg %p83
      %p304 = pneg %p80
      %p305 = pneg %p104
      %p306 = pneg %p101
      %p307 = pneg %p125
      %p308 = pneg %p122
      %p309 = pneg %p146
      %p310 = pneg %p143
      %p311 = pneg %p167
      %p312 = pneg %p164
      %p313 = pneg %p188
      %p314 = pneg %p185
      %p315 = pneg %p209
      %p316 = pneg %p206
      %p317 = pneg %p235
      %p318 = pneg %p232
      %s319 = smul.u32 8, %s20
      %p320 = scmp.lt.s32.totalorder %s319, 15
      %s321 = scalar_select %p320, %s319, 15
      %s322 = smul.addr %s321, 8
      %s323 = scalar_lea.vmem %s9, %s322
      %s324 = smul.u32 8, %s20
      %p325 = scmp.lt.s32.totalorder %s324, 15
      %s326 = scalar_select %p325, %s324, 15
      %s327 = smul.addr %s326, 8
      %s328 = scalar_lea.vmem %s0, %s327
      %s329 = smul.u32 8, %s20
      %s330 = smul.u32 8, %s20
      %p331 = scmp.lt.s32.totalorder %s330, 15
      %s332 = scalar_select %p331, %s330, 15
      %s333 = smul.addr %s332, 8
      %s334 = scalar_lea.vmem %s9, %s333
      %s335 = smul.u32 8, %s20
      %v336 = vld [vmem:[%s328] sm:$0xff]
      %v337 = vld [vmem:[%s328 + $0x8] sm:$0xff]
      %v338 = vld [vmem:[%s328 + $0x10] sm:$0xff]
      %v339 = vld [vmem:[%s328 + $0x18] sm:$0xff]
      %v340 = vld [vmem:[%s328 + $0x20] sm:$0xff]
      %v341 = vld [vmem:[%s328 + $0x28] sm:$0xff]
      %v342 = vld [vmem:[%s328 + $0x30] sm:$0xff]
      %v343 = vld [vmem:[%s328 + $0x38] sm:$0xff]
      %v344 = vld [vmem:[%s1] sm:$0xff]
      %v345 = vld [vmem:[%s1 + $0x8] sm:$0xff]
      %v346 = vld [vmem:[%s1 + $0x10] sm:$0xff]
      %v347 = vld [vmem:[%s1 + $0x18] sm:$0xff]
      %v348 = vld [vmem:[%s1 + $0x20] sm:$0xff]
      %v349 = vld [vmem:[%s1 + $0x28] sm:$0xff]
      %v350 = vld [vmem:[%s1 + $0x30] sm:$0xff]
      %v351 = vld [vmem:[%s1 + $0x38] sm:$0xff]
      %v352 = vld [vmem:[%s1 + $0x40] sm:$0xff]
      %v353 = vld [vmem:[%s1 + $0x48] sm:$0xff]
      %v354 = vld [vmem:[%s1 + $0x50] sm:$0xff]
      %v355 = vld [vmem:[%s1 + $0x58] sm:$0xff]
      %v356 = vld [vmem:[%s1 + $0x60] sm:$0xff]
      %v357 = vld [vmem:[%s1 + $0x68] sm:$0xff]
      %v358 = vld [vmem:[%s1 + $0x70] sm:$0xff]
      %v359 = vld [vmem:[%s1 + $0x78] sm:$0xff]
      %v360 = vld [vmem:[%s2] sm:$0x1]
      %v362 = vlaneseq
      %v363 = vshrl.u32 %v362, 7
      %v364 = vsub.s32 0, %v363
      %v365 = vrot.slane %v360, %v364
      %367 = vmatprep.subr.mxu0 0.0
      %368 = vmatpush1.msra.mxu0 %v344
      %369 = vmatprep.subr.mxu0 0.0
      %370 = vmatpush1.msra.mxu0 %v345
      %371 = vmatprep.subr.mxu0 0.0
      %372 = vmatpush1.msra.mxu0 %v346
      %373 = vmatprep.subr.mxu0 0.0
      %374 = vmatpush1.msra.mxu0 %v347
      %375 = vmatprep.subr.mxu0 0.0
      %376 = vmatpush1.msra.mxu0 %v348
      %377 = vmatprep.subr.mxu0 0.0
      %378 = vmatpush1.msra.mxu0 %v349
      %379 = vmatprep.subr.mxu0 0.0
      %380 = vmatpush1.msra.mxu0 %v350
      %381 = vmatprep.subr.mxu0 0.0
      %382 = vmatpush1.msra.mxu0 %v351
      %383 = vmatprep.subr.mxu0 0.0
      %384 = vmatpush1.msra.mxu0 %v352
      %385 = vmatprep.subr.mxu0 0.0
      %386 = vmatpush1.msra.mxu0 %v353
      %387 = vmatprep.subr.mxu0 0.0
      %388 = vmatpush1.msra.mxu0 %v354
      %389 = vmatprep.subr.mxu0 0.0
      %390 = vmatpush1.msra.mxu0 %v355
      %391 = vmatprep.subr.mxu0 0.0
      %392 = vmatpush1.msra.mxu0 %v356
      %393 = vmatprep.subr.mxu0 0.0
      %394 = vmatpush1.msra.mxu0 %v357
      %395 = vmatprep.subr.mxu0 0.0
      %396 = vmatpush1.msra.mxu0 %v358
      %397 = vmatprep.subr.mxu0 0.0
      %398 = vmatpush1.msra.mxu0 %v359
      %399 = vmatprep.subr.mxu0 0.0
      %400 = vmatpush1.msra.mxu0 0.0
      %401 = vmatprep.subr.mxu0 0.0
      %402 = vmatpush1.msra.mxu0 0.0
      %403 = vmatprep.subr.mxu0 0.0
      %404 = vmatpush1.msra.mxu0 0.0
      %405 = vmatprep.subr.mxu0 0.0
      %406 = vmatpush1.msra.mxu0 0.0
      %407 = vmatprep.subr.mxu0 0.0
      %408 = vmatpush1.msra.mxu0 0.0
      %409 = vmatprep.subr.mxu0 0.0
      %410 = vmatpush1.msra.mxu0 0.0
      %411 = vmatprep.subr.mxu0 0.0
      %412 = vmatpush1.msra.mxu0 0.0
      %413 = vmatprep.subr.mxu0 0.0
      %414 = vmatpush1.msra.mxu0 0.0
      %415 = vmatprep.subr.mxu0 0.0
      %416 = vmatpush1.msra.mxu0 0.0
      %417 = vmatprep.subr.mxu0 0.0
      %418 = vmatpush1.msra.mxu0 0.0
      %419 = vmatprep.subr.mxu0 0.0
      %420 = vmatpush1.msra.mxu0 0.0
      %421 = vmatprep.subr.mxu0 0.0
      %422 = vmatpush1.msra.mxu0 0.0
      %423 = vmatprep.subr.mxu0 0.0
      %424 = vmatpush1.msra.mxu0 0.0
      %425 = vmatprep.subr.mxu0 0.0
      %426 = vmatpush1.msra.mxu0 0.0
      %427 = vmatprep.subr.mxu0 0.0
      %428 = vmatpush1.msra.mxu0 0.0
      %429 = vmatprep.subr.mxu0 0.0
      %430 = vmatpush1.msra.mxu0 0.0
      %431 = vmatprep.mubr.f32.mxu0 0.0
      %432 = vmatmul.mubr.f32.gmra.mrb[0].mxu0 %v336
      %v433 = vpop.f32.mrb[0].mxu0
      %v434 = vadd.f32 %v365, %v433
      %v435 = vpop.f32.mrb[0].mxu0
      %436 = vmatprep.mubr.f32.mxu0 0.0
      %437 = vmatmul.mubr.f32.gmra.mrb[0].mxu0 %v337
      %v438 = vpop.f32.mrb[0].mxu0
      %v439 = vadd.f32 %v365, %v438
      %v440 = vpop.f32.mrb[0].mxu0
      %441 = vmatprep.mubr.f32.mxu0 0.0
      %442 = vmatmul.mubr.f32.gmra.mrb[0].mxu0 %v338
      %v443 = vpop.f32.mrb[0].mxu0
      %v444 = vadd.f32 %v365, %v443
      %v445 = vpop.f32.mrb[0].mxu0
      %446 = vmatprep.mubr.f32.mxu0 0.0
      %447 = vmatmul.mubr.f32.gmra.mrb[0].mxu0 %v339
      %v448 = vpop.f32.mrb[0].mxu0
      %v449 = vadd.f32 %v365, %v448
      %v450 = vpop.f32.mrb[0].mxu0
      %451 = vmatprep.mubr.f32.mxu0 0.0
      %452 = vmatmul.mubr.f32.gmra.mrb[0].mxu0 %v340
      %v453 = vpop.f32.mrb[0].mxu0
      %v454 = vadd.f32 %v365, %v453
      %v455 = vpop.f32.mrb[0].mxu0
      %456 = vmatprep.mubr.f32.mxu0 0.0
      %457 = vmatmul.mubr.f32.gmra.mrb[0].mxu0 %v341
      %v458 = vpop.f32.mrb[0].mxu0
      %v459 = vadd.f32 %v365, %v458
      %v460 = vpop.f32.mrb[0].mxu0
      %461 = vmatprep.mubr.f32.mxu0 0.0
      %462 = vmatmul.mubr.f32.gmra.mrb[0].mxu0 %v342
      %v463 = vpop.f32.mrb[0].mxu0
      %v464 = vadd.f32 %v365, %v463
      %v465 = vpop.f32.mrb[0].mxu0
      %466 = vmatprep.mubr.f32.mxu0 0.0
      %467 = vmatmul.mubr.f32.gmra.mrb[0].mxu0 %v343
      %v468 = vpop.f32.mrb[0].mxu0
      %v469 = vadd.f32 %v365, %v468
      %v470 = vpop.f32.mrb[0].mxu0
      %471 = vdwg.mxu0
      %v472 = vmul.f32 %v434, 0.5
      %v473 = vmul.f32 %v439, 0.5
      %v474 = vmul.f32 %v444, 0.5
      %v475 = vmul.f32 %v449, 0.5
      %v476 = vmul.f32 %v454, 0.5
      %v477 = vmul.f32 %v459, 0.5
      %v478 = vmul.f32 %v464, 0.5
      %v479 = vmul.f32 %v469, 0.5
      %v480 = vtanh.pop %v472
      %v481 = vtanh.pop %v473
      %v482 = vtanh.pop %v474
      %v483 = vtanh.pop %v475
      %v484 = vtanh.pop %v476
      %v485 = vtanh.pop %v477
      %v486 = vtanh.pop %v478
      %v487 = vtanh.pop %v479
      %v488 = vadd.f32 %v480, 1.0
      %v489 = vadd.f32 %v481, 1.0
      %v490 = vadd.f32 %v482, 1.0
      %v491 = vadd.f32 %v483, 1.0
      %v492 = vadd.f32 %v484, 1.0
      %v493 = vadd.f32 %v485, 1.0
      %v494 = vadd.f32 %v486, 1.0
      %v495 = vadd.f32 %v487, 1.0
      %v496 = vmul.f32 %v488, 0.5
      %v497 = vmul.f32 %v489, 0.5
      %v498 = vmul.f32 %v490, 0.5
      %v499 = vmul.f32 %v491, 0.5
      %v500 = vmul.f32 %v492, 0.5
      %v501 = vmul.f32 %v493, 0.5
      %v502 = vmul.f32 %v494, 0.5
      %v503 = vmul.f32 %v495, 0.5
      %v504 = vld [vmem:[%s3] sm:$0xff]
      %v505 = vld [vmem:[%s3 + $0x8] sm:$0xff]
      %v506 = vld [vmem:[%s3 + $0x10] sm:$0xff]
      %v507 = vld [vmem:[%s3 + $0x18] sm:$0xff]
      %v508 = vld [vmem:[%s3 + $0x20] sm:$0xff]
      %v509 = vld [vmem:[%s3 + $0x28] sm:$0xff]
      %v510 = vld [vmem:[%s3 + $0x30] sm:$0xff]
      %v511 = vld [vmem:[%s3 + $0x38] sm:$0xff]
      %v512 = vld [vmem:[%s3 + $0x40] sm:$0xff]
      %v513 = vld [vmem:[%s3 + $0x48] sm:$0xff]
      %v514 = vld [vmem:[%s3 + $0x50] sm:$0xff]
      %v515 = vld [vmem:[%s3 + $0x58] sm:$0xff]
      %v516 = vld [vmem:[%s3 + $0x60] sm:$0xff]
      %v517 = vld [vmem:[%s3 + $0x68] sm:$0xff]
      %v518 = vld [vmem:[%s3 + $0x70] sm:$0xff]
      %v519 = vld [vmem:[%s3 + $0x78] sm:$0xff]
      %v520 = vld [vmem:[%s4] sm:$0x1]
      %v522 = vlaneseq
      %v523 = vshrl.u32 %v522, 7
      %v524 = vsub.s32 0, %v523
      %v525 = vrot.slane %v520, %v524
      %527 = vmatprep.subr.mxu0 0.0
      %528 = vmatpush1.msra.mxu0 %v504
      %529 = vmatprep.subr.mxu0 0.0
      %530 = vmatpush1.msra.mxu0 %v505
      %531 = vmatprep.subr.mxu0 0.0
      %532 = vmatpush1.msra.mxu0 %v506
      %533 = vmatprep.subr.mxu0 0.0
      %534 = vmatpush1.msra.mxu0 %v507
      %535 = vmatprep.subr.mxu0 0.0
      %536 = vmatpush1.msra.mxu0 %v508
      %537 = vmatprep.subr.mxu0 0.0
      %538 = vmatpush1.msra.mxu0 %v509
      %539 = vmatprep.subr.mxu0 0.0
      %540 = vmatpush1.msra.mxu0 %v510
      %541 = vmatprep.subr.mxu0 0.0
      %542 = vmatpush1.msra.mxu0 %v511
      %543 = vmatprep.subr.mxu0 0.0
      %544 = vmatpush1.msra.mxu0 %v512
      %545 = vmatprep.subr.mxu0 0.0
      %546 = vmatpush1.msra.mxu0 %v513
      %547 = vmatprep.subr.mxu0 0.0
      %548 = vmatpush1.msra.mxu0 %v514
      %549 = vmatprep.subr.mxu0 0.0
      %550 = vmatpush1.msra.mxu0 %v515
      %551 = vmatprep.subr.mxu0 0.0
      %552 = vmatpush1.msra.mxu0 %v516
      %553 = vmatprep.subr.mxu0 0.0
      %554 = vmatpush1.msra.mxu0 %v517
      %555 = vmatprep.subr.mxu0 0.0
      %556 = vmatpush1.msra.mxu0 %v518
      %557 = vmatprep.subr.mxu0 0.0
      %558 = vmatpush1.msra.mxu0 %v519
      %559 = vmatprep.subr.mxu0 0.0
      %560 = vmatpush1.msra.mxu0 0.0
      %561 = vmatprep.subr.mxu0 0.0
      %562 = vmatpush1.msra.mxu0 0.0
      %563 = vmatprep.subr.mxu0 0.0
      %564 = vmatpush1.msra.mxu0 0.0
      %565 = vmatprep.subr.mxu0 0.0
      %566 = vmatpush1.msra.mxu0 0.0
      %567 = vmatprep.subr.mxu0 0.0
      %568 = vmatpush1.msra.mxu0 0.0
      %569 = vmatprep.subr.mxu0 0.0
      %570 = vmatpush1.msra.mxu0 0.0
      %571 = vmatprep.subr.mxu0 0.0
      %572 = vmatpush1.msra.mxu0 0.0
      %573 = vmatprep.subr.mxu0 0.0
      %574 = vmatpush1.msra.mxu0 0.0
      %575 = vmatprep.subr.mxu0 0.0
      %576 = vmatpush1.msra.mxu0 0.0
      %577 = vmatprep.subr.mxu0 0.0
      %578 = vmatpush1.msra.mxu0 0.0
      %579 = vmatprep.subr.mxu0 0.0
      %580 = vmatpush1.msra.mxu0 0.0
      %581 = vmatprep.subr.mxu0 0.0
      %582 = vmatpush1.msra.mxu0 0.0
      %583 = vmatprep.subr.mxu0 0.0
      %584 = vmatpush1.msra.mxu0 0.0
      %585 = vmatprep.subr.mxu0 0.0
      %586 = vmatpush1.msra.mxu0 0.0
      %587 = vmatprep.subr.mxu0 0.0
      %588 = vmatpush1.msra.mxu0 0.0
      %589 = vmatprep.subr.mxu0 0.0
      %590 = vmatpush1.msra.mxu0 0.0
      %591 = vmatprep.mubr.f32.mxu0 0.0
      %592 = vmatmul.mubr.f32.gmra.mrb[0].mxu0 %v496
      %v593 = vpop.f32.mrb[0].mxu0
      %v594 = vadd.f32 %v525, %v593
      %v595 = vpop.f32.mrb[0].mxu0
      %596 = vmatprep.mubr.f32.mxu0 0.0
      %597 = vmatmul.mubr.f32.gmra.mrb[0].mxu0 %v497
      %v598 = vpop.f32.mrb[0].mxu0
      %v599 = vadd.f32 %v525, %v598
      %v600 = vpop.f32.mrb[0].mxu0
      %601 = vmatprep.mubr.f32.mxu0 0.0
      %602 = vmatmul.mubr.f32.gmra.mrb[0].mxu0 %v498
      %v603 = vpop.f32.mrb[0].mxu0
      %v604 = vadd.f32 %v525, %v603
      %v605 = vpop.f32.mrb[0].mxu0
      %606 = vmatprep.mubr.f32.mxu0 0.0
      %607 = vmatmul.mubr.f32.gmra.mrb[0].mxu0 %v499
      %v608 = vpop.f32.mrb[0].mxu0
      %v609 = vadd.f32 %v525, %v608
      %v610 = vpop.f32.mrb[0].mxu0
      %611 = vmatprep.mubr.f32.mxu0 0.0
      %612 = vmatmul.mubr.f32.gmra.mrb[0].mxu0 %v500
      %v613 = vpop.f32.mrb[0].mxu0
      %v614 = vadd.f32 %v525, %v613
      %v615 = vpop.f32.mrb[0].mxu0
      %616 = vmatprep.mubr.f32.mxu0 0.0
      %617 = vmatmul.mubr.f32.gmra.mrb[0].mxu0 %v501
      %v618 = vpop.f32.mrb[0].mxu0
      %v619 = vadd.f32 %v525, %v618
      %v620 = vpop.f32.mrb[0].mxu0
      %621 = vmatprep.mubr.f32.mxu0 0.0
      %622 = vmatmul.mubr.f32.gmra.mrb[0].mxu0 %v502
      %v623 = vpop.f32.mrb[0].mxu0
      %v624 = vadd.f32 %v525, %v623
      %v625 = vpop.f32.mrb[0].mxu0
      %626 = vmatprep.mubr.f32.mxu0 0.0
      %627 = vmatmul.mubr.f32.gmra.mrb[0].mxu0 %v503
      %v628 = vpop.f32.mrb[0].mxu0
      %v629 = vadd.f32 %v525, %v628
      %v630 = vpop.f32.mrb[0].mxu0
      %631 = vdwg.mxu0
      %v632 = vmul.f32 %v594, 0.5
      %v633 = vmul.f32 %v599, 0.5
      %v634 = vmul.f32 %v604, 0.5
      %v635 = vmul.f32 %v609, 0.5
      %v636 = vmul.f32 %v614, 0.5
      %v637 = vmul.f32 %v619, 0.5
      %v638 = vmul.f32 %v624, 0.5
      %v639 = vmul.f32 %v629, 0.5
      %v640 = vtanh.pop %v632
      %v641 = vtanh.pop %v633
      %v642 = vtanh.pop %v634
      %v643 = vtanh.pop %v635
      %v644 = vtanh.pop %v636
      %v645 = vtanh.pop %v637
      %v646 = vtanh.pop %v638
      %v647 = vtanh.pop %v639
      %v648 = vadd.f32 %v640, 1.0
      %v649 = vadd.f32 %v641, 1.0
      %v650 = vadd.f32 %v642, 1.0
      %v651 = vadd.f32 %v643, 1.0
      %v652 = vadd.f32 %v644, 1.0
      %v653 = vadd.f32 %v645, 1.0
      %v654 = vadd.f32 %v646, 1.0
      %v655 = vadd.f32 %v647, 1.0
      %v656 = vmul.f32 %v648, 0.5
      %v657 = vmul.f32 %v649, 0.5
      %v658 = vmul.f32 %v650, 0.5
      %v659 = vmul.f32 %v651, 0.5
      %v660 = vmul.f32 %v652, 0.5
      %v661 = vmul.f32 %v653, 0.5
      %v662 = vmul.f32 %v654, 0.5
      %v663 = vmul.f32 %v655, 0.5
      %v664 = vld [vmem:[%s5] sm:$0xff]
      %v665 = vld [vmem:[%s5 + $0x8] sm:$0xff]
      %v666 = vld [vmem:[%s5 + $0x10] sm:$0xff]
      %v667 = vld [vmem:[%s5 + $0x18] sm:$0xff]
      %v668 = vld [vmem:[%s5 + $0x20] sm:$0xff]
      %v669 = vld [vmem:[%s5 + $0x28] sm:$0xff]
      %v670 = vld [vmem:[%s5 + $0x30] sm:$0xff]
      %v671 = vld [vmem:[%s5 + $0x38] sm:$0xff]
      %v672 = vld [vmem:[%s5 + $0x40] sm:$0xff]
      %v673 = vld [vmem:[%s5 + $0x48] sm:$0xff]
      %v674 = vld [vmem:[%s5 + $0x50] sm:$0xff]
      %v675 = vld [vmem:[%s5 + $0x58] sm:$0xff]
      %v676 = vld [vmem:[%s5 + $0x60] sm:$0xff]
      %v677 = vld [vmem:[%s5 + $0x68] sm:$0xff]
      %v678 = vld [vmem:[%s5 + $0x70] sm:$0xff]
      %v679 = vld [vmem:[%s5 + $0x78] sm:$0xff]
      %v680 = vld [vmem:[%s6] sm:$0x1]
      %v682 = vlaneseq
      %v683 = vshrl.u32 %v682, 7
      %v684 = vsub.s32 0, %v683
      %v685 = vrot.slane %v680, %v684
      %687 = vmatprep.subr.mxu0 0.0
      %688 = vmatpush1.msra.mxu0 %v664
      %689 = vmatprep.subr.mxu0 0.0
      %690 = vmatpush1.msra.mxu0 %v665
      %691 = vmatprep.subr.mxu0 0.0
      %692 = vmatpush1.msra.mxu0 %v666
      %693 = vmatprep.subr.mxu0 0.0
      %694 = vmatpush1.msra.mxu0 %v667
      %695 = vmatprep.subr.mxu0 0.0
      %696 = vmatpush1.msra.mxu0 %v668
      %697 = vmatprep.subr.mxu0 0.0
      %698 = vmatpush1.msra.mxu0 %v669
      %699 = vmatprep.subr.mxu0 0.0
      %700 = vmatpush1.msra.mxu0 %v670
      %701 = vmatprep.subr.mxu0 0.0
      %702 = vmatpush1.msra.mxu0 %v671
      %703 = vmatprep.subr.mxu0 0.0
      %704 = vmatpush1.msra.mxu0 %v672
      %705 = vmatprep.subr.mxu0 0.0
      %706 = vmatpush1.msra.mxu0 %v673
      %707 = vmatprep.subr.mxu0 0.0
      %708 = vmatpush1.msra.mxu0 %v674
      %709 = vmatprep.subr.mxu0 0.0
      %710 = vmatpush1.msra.mxu0 %v675
      %711 = vmatprep.subr.mxu0 0.0
      %712 = vmatpush1.msra.mxu0 %v676
      %713 = vmatprep.subr.mxu0 0.0
      %714 = vmatpush1.msra.mxu0 %v677
      %715 = vmatprep.subr.mxu0 0.0
      %716 = vmatpush1.msra.mxu0 %v678
      %717 = vmatprep.subr.mxu0 0.0
      %718 = vmatpush1.msra.mxu0 %v679
      %719 = vmatprep.subr.mxu0 0.0
      %720 = vmatpush1.msra.mxu0 0.0
      %721 = vmatprep.subr.mxu0 0.0
      %722 = vmatpush1.msra.mxu0 0.0
      %723 = vmatprep.subr.mxu0 0.0
      %724 = vmatpush1.msra.mxu0 0.0
      %725 = vmatprep.subr.mxu0 0.0
      %726 = vmatpush1.msra.mxu0 0.0
      %727 = vmatprep.subr.mxu0 0.0
      %728 = vmatpush1.msra.mxu0 0.0
      %729 = vmatprep.subr.mxu0 0.0
      %730 = vmatpush1.msra.mxu0 0.0
      %731 = vmatprep.subr.mxu0 0.0
      %732 = vmatpush1.msra.mxu0 0.0
      %733 = vmatprep.subr.mxu0 0.0
      %734 = vmatpush1.msra.mxu0 0.0
      %735 = vmatprep.subr.mxu0 0.0
      %736 = vmatpush1.msra.mxu0 0.0
      %737 = vmatprep.subr.mxu0 0.0
      %738 = vmatpush1.msra.mxu0 0.0
      %739 = vmatprep.subr.mxu0 0.0
      %740 = vmatpush1.msra.mxu0 0.0
      %741 = vmatprep.subr.mxu0 0.0
      %742 = vmatpush1.msra.mxu0 0.0
      %743 = vmatprep.subr.mxu0 0.0
      %744 = vmatpush1.msra.mxu0 0.0
      %745 = vmatprep.subr.mxu0 0.0
      %746 = vmatpush1.msra.mxu0 0.0
      %747 = vmatprep.subr.mxu0 0.0
      %748 = vmatpush1.msra.mxu0 0.0
      %749 = vmatprep.subr.mxu0 0.0
      %750 = vmatpush1.msra.mxu0 0.0
      %751 = vmatprep.mubr.f32.mxu0 0.0
      %752 = vmatmul.mubr.f32.gmra.mrb[0].mxu0 %v656
      %v753 = vpop.f32.mrb[0].mxu0
      %v754 = vadd.f32 %v685, %v753
      %v755 = vpop.f32.mrb[0].mxu0
      %756 = vmatprep.mubr.f32.mxu0 0.0
      %757 = vmatmul.mubr.f32.gmra.mrb[0].mxu0 %v657
      %v758 = vpop.f32.mrb[0].mxu0
      %v759 = vadd.f32 %v685, %v758
      %v760 = vpop.f32.mrb[0].mxu0
      %761 = vmatprep.mubr.f32.mxu0 0.0
      %762 = vmatmul.mubr.f32.gmra.mrb[0].mxu0 %v658
      %v763 = vpop.f32.mrb[0].mxu0
      %v764 = vadd.f32 %v685, %v763
      %v765 = vpop.f32.mrb[0].mxu0
      %766 = vmatprep.mubr.f32.mxu0 0.0
      %767 = vmatmul.mubr.f32.gmra.mrb[0].mxu0 %v659
      %v768 = vpop.f32.mrb[0].mxu0
      %v769 = vadd.f32 %v685, %v768
      %v770 = vpop.f32.mrb[0].mxu0
      %771 = vmatprep.mubr.f32.mxu0 0.0
      %772 = vmatmul.mubr.f32.gmra.mrb[0].mxu0 %v660
      %v773 = vpop.f32.mrb[0].mxu0
      %v774 = vadd.f32 %v685, %v773
      %v775 = vpop.f32.mrb[0].mxu0
      %776 = vmatprep.mubr.f32.mxu0 0.0
      %777 = vmatmul.mubr.f32.gmra.mrb[0].mxu0 %v661
      %v778 = vpop.f32.mrb[0].mxu0
      %v779 = vadd.f32 %v685, %v778
      %v780 = vpop.f32.mrb[0].mxu0
      %781 = vmatprep.mubr.f32.mxu0 0.0
      %782 = vmatmul.mubr.f32.gmra.mrb[0].mxu0 %v662
      %v783 = vpop.f32.mrb[0].mxu0
      %v784 = vadd.f32 %v685, %v783
      %v785 = vpop.f32.mrb[0].mxu0
      %786 = vmatprep.mubr.f32.mxu0 0.0
      %787 = vmatmul.mubr.f32.gmra.mrb[0].mxu0 %v663
      %v788 = vpop.f32.mrb[0].mxu0
      %v789 = vadd.f32 %v685, %v788
      %v790 = vpop.f32.mrb[0].mxu0
      %791 = vdwg.mxu0
      %v792 = vmul.f32 %v754, 0.5
      %v793 = vmul.f32 %v759, 0.5
      %v794 = vmul.f32 %v764, 0.5
      %v795 = vmul.f32 %v769, 0.5
      %v796 = vmul.f32 %v774, 0.5
      %v797 = vmul.f32 %v779, 0.5
      %v798 = vmul.f32 %v784, 0.5
      %v799 = vmul.f32 %v789, 0.5
      %v800 = vtanh.pop %v792
      %v801 = vtanh.pop %v793
      %v802 = vtanh.pop %v794
      %v803 = vtanh.pop %v795
      %v804 = vtanh.pop %v796
      %v805 = vtanh.pop %v797
      %v806 = vtanh.pop %v798
      %v807 = vtanh.pop %v799
      %v808 = vadd.f32 %v800, 1.0
      %v809 = vadd.f32 %v801, 1.0
      %v810 = vadd.f32 %v802, 1.0
      %v811 = vadd.f32 %v803, 1.0
      %v812 = vadd.f32 %v804, 1.0
      %v813 = vadd.f32 %v805, 1.0
      %v814 = vadd.f32 %v806, 1.0
      %v815 = vadd.f32 %v807, 1.0
      %v816 = vmul.f32 %v808, 0.5
      %v817 = vmul.f32 %v809, 0.5
      %v818 = vmul.f32 %v810, 0.5
      %v819 = vmul.f32 %v811, 0.5
      %v820 = vmul.f32 %v812, 0.5
      %v821 = vmul.f32 %v813, 0.5
      %v822 = vmul.f32 %v814, 0.5
      %v823 = vmul.f32 %v815, 0.5
      %v824 = vld [vmem:[%s7] sm:$0xff]
      %v825 = vld [vmem:[%s7 + $0x8] sm:$0xff]
      %v826 = vld [vmem:[%s7 + $0x10] sm:$0xff]
      %v827 = vld [vmem:[%s7 + $0x18] sm:$0xff]
      %v828 = vld [vmem:[%s7 + $0x20] sm:$0xff]
      %v829 = vld [vmem:[%s7 + $0x28] sm:$0xff]
      %v830 = vld [vmem:[%s7 + $0x30] sm:$0xff]
      %v831 = vld [vmem:[%s7 + $0x38] sm:$0xff]
      %v832 = vld [vmem:[%s7 + $0x40] sm:$0xff]
      %v833 = vld [vmem:[%s7 + $0x48] sm:$0xff]
      %v834 = vld [vmem:[%s7 + $0x50] sm:$0xff]
      %v835 = vld [vmem:[%s7 + $0x58] sm:$0xff]
      %v836 = vld [vmem:[%s7 + $0x60] sm:$0xff]
      %v837 = vld [vmem:[%s7 + $0x68] sm:$0xff]
      %v838 = vld [vmem:[%s7 + $0x70] sm:$0xff]
      %v839 = vld [vmem:[%s7 + $0x78] sm:$0xff]
      %v840 = vld [vmem:[%s8] sm:$0x1]
      %v842 = vlaneseq
      %v843 = vshrl.u32 %v842, 7
      %v844 = vsub.s32 0, %v843
      %v845 = vrot.slane %v840, %v844
      %847 = vmatprep.subr.mxu0 0.0
      %848 = vmatpush1.msra.mxu0 %v824
      %849 = vmatprep.subr.mxu0 0.0
      %850 = vmatpush1.msra.mxu0 %v825
      %851 = vmatprep.subr.mxu0 0.0
      %852 = vmatpush1.msra.mxu0 %v826
      %853 = vmatprep.subr.mxu0 0.0
      %854 = vmatpush1.msra.mxu0 %v827
      %855 = vmatprep.subr.mxu0 0.0
      %856 = vmatpush1.msra.mxu0 %v828
      %857 = vmatprep.subr.mxu0 0.0
      %858 = vmatpush1.msra.mxu0 %v829
      %859 = vmatprep.subr.mxu0 0.0
      %860 = vmatpush1.msra.mxu0 %v830
      %861 = vmatprep.subr.mxu0 0.0
      %862 = vmatpush1.msra.mxu0 %v831
      %863 = vmatprep.subr.mxu0 0.0
      %864 = vmatpush1.msra.mxu0 %v832
      %865 = vmatprep.subr.mxu0 0.0
      %866 = vmatpush1.msra.mxu0 %v833
      %867 = vmatprep.subr.mxu0 0.0
      %868 = vmatpush1.msra.mxu0 %v834
      %869 = vmatprep.subr.mxu0 0.0
      %870 = vmatpush1.msra.mxu0 %v835
      %871 = vmatprep.subr.mxu0 0.0
      %872 = vmatpush1.msra.mxu0 %v836
      %873 = vmatprep.subr.mxu0 0.0
      %874 = vmatpush1.msra.mxu0 %v837
      %875 = vmatprep.subr.mxu0 0.0
      %876 = vmatpush1.msra.mxu0 %v838
      %877 = vmatprep.subr.mxu0 0.0
      %878 = vmatpush1.msra.mxu0 %v839
      %879 = vmatprep.subr.mxu0 0.0
      %880 = vmatpush1.msra.mxu0 0.0
      %881 = vmatprep.subr.mxu0 0.0
      %882 = vmatpush1.msra.mxu0 0.0
      %883 = vmatprep.subr.mxu0 0.0
      %884 = vmatpush1.msra.mxu0 0.0
      %885 = vmatprep.subr.mxu0 0.0
      %886 = vmatpush1.msra.mxu0 0.0
      %887 = vmatprep.subr.mxu0 0.0
      %888 = vmatpush1.msra.mxu0 0.0
      %889 = vmatprep.subr.mxu0 0.0
      %890 = vmatpush1.msra.mxu0 0.0
      %891 = vmatprep.subr.mxu0 0.0
      %892 = vmatpush1.msra.mxu0 0.0
      %893 = vmatprep.subr.mxu0 0.0
      %894 = vmatpush1.msra.mxu0 0.0
      %895 = vmatprep.subr.mxu0 0.0
      %896 = vmatpush1.msra.mxu0 0.0
      %897 = vmatprep.subr.mxu0 0.0
      %898 = vmatpush1.msra.mxu0 0.0
      %899 = vmatprep.subr.mxu0 0.0
      %900 = vmatpush1.msra.mxu0 0.0
      %901 = vmatprep.subr.mxu0 0.0
      %902 = vmatpush1.msra.mxu0 0.0
      %903 = vmatprep.subr.mxu0 0.0
      %904 = vmatpush1.msra.mxu0 0.0
      %905 = vmatprep.subr.mxu0 0.0
      %906 = vmatpush1.msra.mxu0 0.0
      %907 = vmatprep.subr.mxu0 0.0
      %908 = vmatpush1.msra.mxu0 0.0
      %909 = vmatprep.subr.mxu0 0.0
      %910 = vmatpush1.msra.mxu0 0.0
      %911 = vmatprep.mubr.f32.mxu0 0.0
      %912 = vmatmul.mubr.f32.gmra.mrb[0].mxu0 %v816
      %v913 = vpop.f32.mrb[0].mxu0
      %v914 = vadd.f32 %v845, %v913
      %v915 = vpop.f32.mrb[0].mxu0
      %916 = vmatprep.mubr.f32.mxu0 0.0
      %917 = vmatmul.mubr.f32.gmra.mrb[0].mxu0 %v817
      %v918 = vpop.f32.mrb[0].mxu0
      %v919 = vadd.f32 %v845, %v918
      %v920 = vpop.f32.mrb[0].mxu0
      %921 = vmatprep.mubr.f32.mxu0 0.0
      %922 = vmatmul.mubr.f32.gmra.mrb[0].mxu0 %v818
      %v923 = vpop.f32.mrb[0].mxu0
      %v924 = vadd.f32 %v845, %v923
      %v925 = vpop.f32.mrb[0].mxu0
      %926 = vmatprep.mubr.f32.mxu0 0.0
      %927 = vmatmul.mubr.f32.gmra.mrb[0].mxu0 %v819
      %v928 = vpop.f32.mrb[0].mxu0
      %v929 = vadd.f32 %v845, %v928
      %v930 = vpop.f32.mrb[0].mxu0
      %931 = vmatprep.mubr.f32.mxu0 0.0
      %932 = vmatmul.mubr.f32.gmra.mrb[0].mxu0 %v820
      %v933 = vpop.f32.mrb[0].mxu0
      %v934 = vadd.f32 %v845, %v933
      %v935 = vpop.f32.mrb[0].mxu0
      %936 = vmatprep.mubr.f32.mxu0 0.0
      %937 = vmatmul.mubr.f32.gmra.mrb[0].mxu0 %v821
      %v938 = vpop.f32.mrb[0].mxu0
      %v939 = vadd.f32 %v845, %v938
      %v940 = vpop.f32.mrb[0].mxu0
      %941 = vmatprep.mubr.f32.mxu0 0.0
      %942 = vmatmul.mubr.f32.gmra.mrb[0].mxu0 %v822
      %v943 = vpop.f32.mrb[0].mxu0
      %v944 = vadd.f32 %v845, %v943
      %v945 = vpop.f32.mrb[0].mxu0
      %946 = vmatprep.mubr.f32.mxu0 0.0
      %947 = vmatmul.mubr.f32.gmra.mrb[0].mxu0 %v823
      %v948 = vpop.f32.mrb[0].mxu0
      %v949 = vadd.f32 %v845, %v948
      %v950 = vpop.f32.mrb[0].mxu0
      %951 = vdwg.mxu0
      %952 = vst [vmem:[%s334] sm:$0xff] %v914
      %953 = vst [vmem:[%s334 + $0x8] sm:$0xff] %v919
      %954 = vst [vmem:[%s334 + $0x10] sm:$0xff] %v924
      %955 = vst [vmem:[%s334 + $0x18] sm:$0xff] %v929
      %956 = vst [vmem:[%s334 + $0x20] sm:$0xff] %v934
      %957 = vst [vmem:[%s334 + $0x28] sm:$0xff] %v939
      %958 = vst [vmem:[%s334 + $0x30] sm:$0xff] %v944
      %959 = vst [vmem:[%s334 + $0x38] sm:$0xff] %v949
      %s960 = smul.u32 8, %s20
      %p961 = scmp.lt.s32.totalorder %s960, 15
      %s962 = scalar_select %p961, %s960, 15
      %s963 = smul.addr %s962, 8
      %s964 = scalar_lea.vmem %s9, %s963
      // Predicated region
      $region57: #{_fcn_forward_packed.1} parent=55 // pred_check
        %p965 = pneg %p232
      $region58: #{_fcn_forward_packed.1} parent=55 // pred_check_branch
        %967 = sbr.rel (%p965) target = $region60
      $region59: #{_fcn_forward_packed.1} parent=55 // pred_region
        %s968 = smul.u32 8, %s20
      $region60: #{_fcn_forward_packed.1} parent=55 // pred_fallthru
        _
    $region56: #{_fcn_forward_packed.1} parent=5 // pred_fallthru
      _
    %p969 = scmp.le.s32.totalorder 2, %s15
    // Predicated region
    $region61: #{_fcn_forward_packed.1} parent=5 // pred_check
      %p970 = pneg %p969
    $region62: #{_fcn_forward_packed.1} parent=5 // pred_check_branch
      %972 = sbr.rel (%p970) target = $region64
    $region63: #{_fcn_forward_packed.1} parent=5 // pred_region
      %s973 = ssub.s32 %s15, 2
      // Predicated region
      $region65: #{_fcn_forward_packed.1} parent=63 // pred_check
        %p974 = pneg %p238
      $region66: #{_fcn_forward_packed.1} parent=63 // pred_check_branch
        %976 = sbr.rel (%p974) target = $region68
      $region67: #{_fcn_forward_packed.1} parent=63 // pred_region
        %s977 = smul.u32 8, %s21
        %p978 = scmp.lt.s32.totalorder %s977, 15
        %s979 = scalar_select %p978, %s977, 15
        %s980 = smul.addr %s979, 8
        %s981 = scalar_lea.vmem %s9, %s980
      $region68: #{_fcn_forward_packed.1} parent=63 // pred_fallthru
        _
    $region64: #{_fcn_forward_packed.1} parent=5 // pred_fallthru
      _
  $region6: #{_fcn_forward_packed.1} parent=0 // loop_footer
    %s19 = sadd.s32 1, %s15
  $region7: #{_fcn_forward_packed.1} parent=0 // loop_footer_branch
    %14 = sbr.rel target = $region3
  $region8: #{_fcn_forward_packed.1} parent=0 // loop_exit
    _

</llo_original>
